<compile_context>
chip_gen: v5e
topology: v5e:2x2
jax: 0.10.0
libtpu: 0.0.40
codegen_flags: <defaults>
</compile_context>

<pallas_src>
import functools

import jax
import jax.numpy as jnp
from jax import lax
from jax.experimental import pallas as pl
from jax.experimental.pallas import tpu as pltpu

EPS = 1e-5


# ------------------------------ fused kernel --------------------------------

def _fused_kernel(x_ref, p_ref, w1_ref, b1_ref, k2_ref, b2_ref, k3_ref, b3_ref,
                  ws_ref, bs_ref, o_ref, *, eps):
    """One batch sample per grid step.  All tensors are 2D, lane-dense."""

    def cube_norm(y):
        # per-sample CubeNorm over the whole tensor, unbiased var (torch.var),
        # one-pass moments (sum / sum-of-squares), rsqrt on the EUP.
        n = y.size
        s = jnp.sum(y)
        ss = jnp.sum(y * y)
        mean = s / n
        var = (ss - n * mean * mean) / (n - 1)
        return (y - mean) * lax.rsqrt(var + eps)

    x = x_ref[0]          # (Cin, H*W)          = (16, 256)   [c, h*W + w]
    pat = p_ref[0]        # (Cin*4, Ho*Wo)      = (64, 64)    im2col patches

    # shortcut = CubeNorm(Conv2d(k=2, s=2)(x))  -> (Cout, Ho*Wo) = (8, 64)
    ys = jnp.dot(ws_ref[...], pat, preferred_element_type=jnp.float32) + bs_ref[...]
    sc = cube_norm(ys)                                  # [o, o3*Cout + o2]

    # conv1 (1x1) + CubeNorm + ReLU   (ReLU commutes with the permute)
    y1 = jnp.dot(w1_ref[...], x, preferred_element_type=jnp.float32) + b1_ref[...]
    m1 = jnp.maximum(cube_norm(y1), 0.0)                # (8, 256) [o, h*W + w]

    # conv2: contracts the w axis.  Folded into K2 = I_H (x) w2^T so it is a
    # plain right-matmul on the mode-1 matricization (no relayout needed).
    y2 = jnp.dot(m1, k2_ref[...], preferred_element_type=jnp.float32) + b2_ref[...]
    m2 = jnp.maximum(cube_norm(y2), 0.0)                # (8, 128) [o, h*Cout + o2]

    # conv3: contracts the h axis, folded into K3 = w3^T (x) I_Cout; then the
    # residual add with the shortcut (already in the matching layout) + ReLU.
    y3 = jnp.dot(m2, k3_ref[...], preferred_element_type=jnp.float32) + b3_ref[...]
    o_ref[0] = jnp.maximum(y3 + sc, 0.0).astype(o_ref.dtype)   # (8, 64) [o, o3*Cout+o2]


# ------------------------------- forward pass --------------------------------

def cube_downsample_v2_forward(params, x):
    """x: NCHW float32, with Cin == H == W == 2*Cout (module's cube layout)."""
    B, Cin, H, W = x.shape
    Cout = params["w1"].shape[0]
    S = H * W
    Ho, Wo = H // 2, W // 2

    # ---- cheap wrapper-side parameter / input plumbing (all tiny) ----
    x_flat = x.reshape(B, Cin, S)                                   # [b, c, h*W+w]

    # im2col for the 2x2/stride-2 shortcut:
    #   pat[b, c*4 + dh*2 + dw, ho*Wo + wo] = x[b, c, 2ho+dh, 2wo+dw]
    pat = x.reshape(B, Cin, Ho, 2, Wo, 2)
    pat = jnp.transpose(pat, (0, 1, 3, 5, 2, 4)).reshape(B, Cin * 4, Ho * Wo)
    ws_flat = params["ws"].reshape(Cout, Cin * 4)

    w1m = params["w1"].reshape(Cout, Cin)
    w2m = params["w2"].reshape(Cout, W)          # conv2 contracts the w axis
    w3m = params["w3"].reshape(Cout, H)          # conv3 contracts the h axis

    # Kronecker-structured matrices that implement the axis-cycling convs as
    # right-matmuls on the mode-1 matricization (built from the tiny weights).
    eye_h = jnp.eye(H, dtype=jnp.float32)
    eye_c = jnp.eye(Cout, dtype=jnp.float32)
    k2 = jnp.kron(eye_h, w2m.T)                  # (H*W, H*Cout)   = (256, 128)
    k3 = jnp.kron(w3m.T, eye_c)                  # (H*Cout, Cout^2) = (128, 64)

    b1col = params["b1"].reshape(Cout, 1)
    b2row = jnp.tile(params["b2"], H).reshape(1, H * Cout)          # b2[o2] at h*Cout+o2
    b3row = jnp.repeat(params["b3"], Cout).reshape(1, Cout * Cout)  # b3[o3] at o3*Cout+o2
    bscol = params["bs"].reshape(Cout, 1)

    out_flat = pl.pallas_call(
        functools.partial(_fused_kernel, eps=EPS),
        out_shape=jax.ShapeDtypeStruct((B, Cout, Cout * Cout), jnp.float32),
        grid=(B,),
        in_specs=[
            pl.BlockSpec((1, Cin, S), lambda i: (i, 0, 0)),
            pl.BlockSpec((1, Cin * 4, Ho * Wo), lambda i: (i, 0, 0)),
            pl.BlockSpec((Cout, Cin), lambda i: (0, 0)),
            pl.BlockSpec((Cout, 1), lambda i: (0, 0)),
            pl.BlockSpec((S, H * Cout), lambda i: (0, 0)),
            pl.BlockSpec((1, H * Cout), lambda i: (0, 0)),
            pl.BlockSpec((H * Cout, Cout * Cout), lambda i: (0, 0)),
            pl.BlockSpec((1, Cout * Cout), lambda i: (0, 0)),
            pl.BlockSpec((Cout, Cin * 4), lambda i: (0, 0)),
            pl.BlockSpec((Cout, 1), lambda i: (0, 0)),
        ],
        out_specs=pl.BlockSpec((1, Cout, Cout * Cout), lambda i: (i, 0, 0)),
        compiler_params=pltpu.CompilerParams(dimension_semantics=("parallel",)),
    )(x_flat, pat, w1m, b1col, k2, b2row, k3, b3row, ws_flat, bscol)

    # out_flat[b, o, o3*Cout + o2] == out[b, o, o3, o2]  (pure row-major reshape)
    return out_flat.reshape(B, Cout, Cout, Cout)


# ------------------------------- parameters ----------------------------------

def init_params(key, in_planes, out_planes):
    ks = jax.random.split(key, 8)

    def u(k, shape, fan_in):
        bound = 1.0 / (fan_in ** 0.5)
        return jax.random.uniform(k, shape, jnp.float32, -bound, bound)

    return {
        "w1": u(ks[0], (out_planes, in_planes, 1, 1), in_planes),
        "b1": u(ks[1], (out_planes,), in_planes),
        "w2": u(ks[2], (out_planes, in_planes, 1, 1), in_planes),
        "b2": u(ks[3], (out_planes,), in_planes),
        "w3": u(ks[4], (out_planes, in_planes, 1, 1), in_planes),
        "b3": u(ks[5], (out_planes,), in_planes),
        "ws": u(ks[6], (out_planes, in_planes, 2, 2), in_planes * 4),
        "bs": u(ks[7], (out_planes,), in_planes * 4),
    }


# ------------------------------ pure-JAX reference ---------------------------

def _cube_norm_ref(x, eps=EPS):
    mean = jnp.mean(x, axis=(1, 2, 3), keepdims=True)
    var = jnp.sum((x - mean) ** 2, axis=(1, 2, 3), keepdims=True) / (x[0].size - 1)
    return (x - mean) / jnp.sqrt(var + eps)


def _conv2d_ref(x, w, b, stride):
    y = lax.conv_general_dilated(x, w, (stride, stride), "VALID",
                                 dimension_numbers=("NCHW", "OIHW", "NCHW"))
    return y + b[None, :, None, None]


def reference_forward(params, x):
    sc = _cube_norm_ref(_conv2d_ref(x, params["ws"], params["bs"], 2))
    out = _cube_norm_ref(_conv2d_ref(x, params["w1"], params["b1"], 1))
    out = jax.nn.relu(jnp.transpose(out, (0, 3, 1, 2)))
    out = _cube_norm_ref(_conv2d_ref(out, params["w2"], params["b2"], 1))
    out = jax.nn.relu(jnp.transpose(out, (0, 3, 1, 2)))
    out = _conv2d_ref(out, params["w3"], params["b3"], 1)
    return jax.nn.relu(jnp.transpose(out, (0, 3, 1, 2)) + sc)


# ----------------------------------- main ------------------------------------

if __name__ == "__main__":
    key = jax.random.PRNGKey(0)
    kx, kp = jax.random.split(key)

    B, Cout = 2, 8
    Cin = H = W = 2 * Cout                     # 16: required by axis-cycling permutes
    x = jax.random.normal(kx, (B, Cin, H, W), jnp.float32)
    params = init_params(kp, Cin, Cout)

    out = jax.jit(cube_downsample_v2_forward)(params, x)
    out = jax.block_until_ready(out)

    ref = reference_forward(params, x)
    assert out.shape == (B, Cout, Cout, Cout), out.shape
    max_err = float(jnp.max(jnp.abs(out - ref)))
    assert jnp.allclose(out, ref, rtol=2e-3, atol=2e-3), max_err
    print("KERNEL_OK")
</pallas_src>

<mosaic_0001>
module attributes {stable_mosaic.version = 11 : i64} {
  func.func @_fused_kernel(%arg0: i32, %arg1: memref<1x16x256xf32, #tpu.memory_space<vmem>>, %arg2: memref<1x64x64xf32, #tpu.memory_space<vmem>>, %arg3: memref<8x16xf32, #tpu.memory_space<vmem>>, %arg4: memref<8x1xf32, #tpu.memory_space<vmem>>, %arg5: memref<256x128xf32, #tpu.memory_space<vmem>>, %arg6: memref<1x128xf32, #tpu.memory_space<vmem>>, %arg7: memref<128x64xf32, #tpu.memory_space<vmem>>, %arg8: memref<1x64xf32, #tpu.memory_space<vmem>>, %arg9: memref<8x64xf32, #tpu.memory_space<vmem>>, %arg10: memref<8x1xf32, #tpu.memory_space<vmem>>, %arg11: memref<1x8x64xf32, #tpu.memory_space<vmem>>) attributes {dimension_semantics = [#tpu.dimension_semantics<parallel>], iteration_bounds = array<i64: 2>, scalar_prefetch = 0 : i64, scratch_operands = 0 : i64, tpu.core_type = #tpu.core_type<tc>, window_params = [{transform_indices = @transform_0, window_bounds = array<i64: 1, 16, 256>}, {transform_indices = @transform_1, window_bounds = array<i64: 1, 64, 64>}, {pipeline_mode = #tpu.pipeline_mode<synchronous>, transform_indices = @transform_2, window_bounds = array<i64: 8, 16>}, {pipeline_mode = #tpu.pipeline_mode<synchronous>, transform_indices = @transform_3, window_bounds = array<i64: 8, 1>}, {pipeline_mode = #tpu.pipeline_mode<synchronous>, transform_indices = @transform_4, window_bounds = array<i64: 256, 128>}, {pipeline_mode = #tpu.pipeline_mode<synchronous>, transform_indices = @transform_5, window_bounds = array<i64: 1, 128>}, {pipeline_mode = #tpu.pipeline_mode<synchronous>, transform_indices = @transform_6, window_bounds = array<i64: 128, 64>}, {pipeline_mode = #tpu.pipeline_mode<synchronous>, transform_indices = @transform_7, window_bounds = array<i64: 1, 64>}, {pipeline_mode = #tpu.pipeline_mode<synchronous>, transform_indices = @transform_8, window_bounds = array<i64: 8, 64>}, {pipeline_mode = #tpu.pipeline_mode<synchronous>, transform_indices = @transform_9, window_bounds = array<i64: 8, 1>}, {transform_indices = @transform_10, window_bounds = array<i64: 1, 8, 64>}]} {
    %c0 = arith.constant 0 : index
    %c0_0 = arith.constant 0 : index
    %c0_1 = arith.constant 0 : index
    %0 = vector.load %arg1[%c0, %c0_0, %c0_1] : memref<1x16x256xf32, #tpu.memory_space<vmem>>, vector<1x16x256xf32>
    %1 = vector.shape_cast %0 : vector<1x16x256xf32> to vector<16x256xf32>
    %c0_2 = arith.constant 0 : index
    %c0_3 = arith.constant 0 : index
    %c0_4 = arith.constant 0 : index
    %2 = vector.load %arg2[%c0_2, %c0_3, %c0_4] : memref<1x64x64xf32, #tpu.memory_space<vmem>>, vector<1x64x64xf32>
    %3 = vector.shape_cast %2 : vector<1x64x64xf32> to vector<64x64xf32>
    %c0_5 = arith.constant 0 : index
    %c0_6 = arith.constant 0 : index
    %4 = vector.load %arg9[%c0_5, %c0_6] : memref<8x64xf32, #tpu.memory_space<vmem>>, vector<8x64xf32>
    %cst = arith.constant dense<0.000000e+00> : vector<8x64xf32>
    %5 = tpu.matmul %4, %3, %cst {dimension_numbers = #tpu.dot_dimension_numbers<[1], [0], [0], [1], [0, 0, 1, 1], [], []>} : vector<8x64xf32>, vector<64x64xf32>, vector<8x64xf32> -> vector<8x64xf32>
    %c0_7 = arith.constant 0 : index
    %c0_8 = arith.constant 0 : index
    %6 = vector.load %arg10[%c0_7, %c0_8] : memref<8x1xf32, #tpu.memory_space<vmem>>, vector<8x1xf32>
    %7 = vector.broadcast %6 : vector<8x1xf32> to vector<8x64xf32>
    %8 = arith.addf %5, %7 : vector<8x64xf32>
    %9 = vector.shape_cast %8 : vector<8x64xf32> to vector<1x8x64xf32>
    %cst_9 = arith.constant dense<0.000000e+00> : vector<1xf32>
    %10 = vector.multi_reduction <add>, %9, %cst_9 [1, 2] : vector<1x8x64xf32> to vector<1xf32>
    %11 = vector.shape_cast %10 : vector<1xf32> to vector<1x1x1xf32>
    %12 = vector.extract %11[0, 0, 0] : f32 from vector<1x1x1xf32>
    %13 = arith.mulf %8, %8 : vector<8x64xf32>
    %14 = vector.shape_cast %13 : vector<8x64xf32> to vector<1x8x64xf32>
    %cst_10 = arith.constant dense<0.000000e+00> : vector<1xf32>
    %15 = vector.multi_reduction <add>, %14, %cst_10 [1, 2] : vector<1x8x64xf32> to vector<1xf32>
    %16 = vector.shape_cast %15 : vector<1xf32> to vector<1x1x1xf32>
    %17 = vector.extract %16[0, 0, 0] : f32 from vector<1x1x1xf32>
    %cst_11 = arith.constant 5.120000e+02 : f32
    %18 = arith.divf %12, %cst_11 : f32
    %cst_12 = arith.constant 5.120000e+02 : f32
    %19 = arith.mulf %cst_12, %18 : f32
    %20 = arith.mulf %19, %18 : f32
    %21 = arith.subf %17, %20 : f32
    %cst_13 = arith.constant 5.110000e+02 : f32
    %22 = arith.divf %21, %cst_13 : f32
    %23 = vector.broadcast %18 : f32 to vector<8x64xf32>
    %24 = arith.subf %8, %23 : vector<8x64xf32>
    %cst_14 = arith.constant 9.99999974E-6 : f32
    %25 = arith.addf %22, %cst_14 : f32
    %26 = math.rsqrt %25 : f32
    %27 = vector.broadcast %26 : f32 to vector<8x64xf32>
    %28 = arith.mulf %24, %27 : vector<8x64xf32>
    %c0_15 = arith.constant 0 : index
    %c0_16 = arith.constant 0 : index
    %29 = vector.load %arg3[%c0_15, %c0_16] : memref<8x16xf32, #tpu.memory_space<vmem>>, vector<8x16xf32>
    %cst_17 = arith.constant dense<0.000000e+00> : vector<8x256xf32>
    %30 = tpu.matmul %29, %1, %cst_17 {dimension_numbers = #tpu.dot_dimension_numbers<[1], [0], [0], [1], [0, 0, 1, 1], [], []>} : vector<8x16xf32>, vector<16x256xf32>, vector<8x256xf32> -> vector<8x256xf32>
    %c0_18 = arith.constant 0 : index
    %c0_19 = arith.constant 0 : index
    %31 = vector.load %arg4[%c0_18, %c0_19] : memref<8x1xf32, #tpu.memory_space<vmem>>, vector<8x1xf32>
    %32 = vector.broadcast %31 : vector<8x1xf32> to vector<8x256xf32>
    %33 = arith.addf %30, %32 : vector<8x256xf32>
    %34 = vector.shape_cast %33 : vector<8x256xf32> to vector<1x8x256xf32>
    %cst_20 = arith.constant dense<0.000000e+00> : vector<1xf32>
    %35 = vector.multi_reduction <add>, %34, %cst_20 [1, 2] : vector<1x8x256xf32> to vector<1xf32>
    %36 = vector.shape_cast %35 : vector<1xf32> to vector<1x1x1xf32>
    %37 = vector.extract %36[0, 0, 0] : f32 from vector<1x1x1xf32>
    %38 = arith.mulf %33, %33 : vector<8x256xf32>
    %39 = vector.shape_cast %38 : vector<8x256xf32> to vector<1x8x256xf32>
    %cst_21 = arith.constant dense<0.000000e+00> : vector<1xf32>
    %40 = vector.multi_reduction <add>, %39, %cst_21 [1, 2] : vector<1x8x256xf32> to vector<1xf32>
    %41 = vector.shape_cast %40 : vector<1xf32> to vector<1x1x1xf32>
    %42 = vector.extract %41[0, 0, 0] : f32 from vector<1x1x1xf32>
    %cst_22 = arith.constant 2.048000e+03 : f32
    %43 = arith.divf %37, %cst_22 : f32
    %cst_23 = arith.constant 2.048000e+03 : f32
    %44 = arith.mulf %cst_23, %43 : f32
    %45 = arith.mulf %44, %43 : f32
    %46 = arith.subf %42, %45 : f32
    %cst_24 = arith.constant 2.047000e+03 : f32
    %47 = arith.divf %46, %cst_24 : f32
    %48 = vector.broadcast %43 : f32 to vector<8x256xf32>
    %49 = arith.subf %33, %48 : vector<8x256xf32>
    %cst_25 = arith.constant 9.99999974E-6 : f32
    %50 = arith.addf %47, %cst_25 : f32
    %51 = math.rsqrt %50 : f32
    %52 = vector.broadcast %51 : f32 to vector<8x256xf32>
    %53 = arith.mulf %49, %52 : vector<8x256xf32>
    %cst_26 = arith.constant 0.000000e+00 : f32
    %54 = vector.broadcast %cst_26 : f32 to vector<8x256xf32>
    %55 = arith.maximumf %53, %54 : vector<8x256xf32>
    %c0_27 = arith.constant 0 : index
    %c0_28 = arith.constant 0 : index
    %56 = vector.load %arg5[%c0_27, %c0_28] : memref<256x128xf32, #tpu.memory_space<vmem>>, vector<256x128xf32>
    %cst_29 = arith.constant dense<0.000000e+00> : vector<8x128xf32>
    %57 = tpu.matmul %55, %56, %cst_29 {dimension_numbers = #tpu.dot_dimension_numbers<[1], [0], [0], [1], [0, 0, 1, 1], [], []>} : vector<8x256xf32>, vector<256x128xf32>, vector<8x128xf32> -> vector<8x128xf32>
    %c0_30 = arith.constant 0 : index
    %c0_31 = arith.constant 0 : index
    %58 = vector.load %arg6[%c0_30, %c0_31] : memref<1x128xf32, #tpu.memory_space<vmem>>, vector<1x128xf32>
    %59 = vector.broadcast %58 : vector<1x128xf32> to vector<8x128xf32>
    %60 = arith.addf %57, %59 : vector<8x128xf32>
    %61 = vector.shape_cast %60 : vector<8x128xf32> to vector<1x8x128xf32>
    %cst_32 = arith.constant dense<0.000000e+00> : vector<1xf32>
    %62 = vector.multi_reduction <add>, %61, %cst_32 [1, 2] : vector<1x8x128xf32> to vector<1xf32>
    %63 = vector.shape_cast %62 : vector<1xf32> to vector<1x1x1xf32>
    %64 = vector.extract %63[0, 0, 0] : f32 from vector<1x1x1xf32>
    %65 = arith.mulf %60, %60 : vector<8x128xf32>
    %66 = vector.shape_cast %65 : vector<8x128xf32> to vector<1x8x128xf32>
    %cst_33 = arith.constant dense<0.000000e+00> : vector<1xf32>
    %67 = vector.multi_reduction <add>, %66, %cst_33 [1, 2] : vector<1x8x128xf32> to vector<1xf32>
    %68 = vector.shape_cast %67 : vector<1xf32> to vector<1x1x1xf32>
    %69 = vector.extract %68[0, 0, 0] : f32 from vector<1x1x1xf32>
    %cst_34 = arith.constant 1.024000e+03 : f32
    %70 = arith.divf %64, %cst_34 : f32
    %cst_35 = arith.constant 1.024000e+03 : f32
    %71 = arith.mulf %cst_35, %70 : f32
    %72 = arith.mulf %71, %70 : f32
    %73 = arith.subf %69, %72 : f32
    %cst_36 = arith.constant 1.023000e+03 : f32
    %74 = arith.divf %73, %cst_36 : f32
    %75 = vector.broadcast %70 : f32 to vector<8x128xf32>
    %76 = arith.subf %60, %75 : vector<8x128xf32>
    %cst_37 = arith.constant 9.99999974E-6 : f32
    %77 = arith.addf %74, %cst_37 : f32
    %78 = math.rsqrt %77 : f32
    %79 = vector.broadcast %78 : f32 to vector<8x128xf32>
    %80 = arith.mulf %76, %79 : vector<8x128xf32>
    %cst_38 = arith.constant 0.000000e+00 : f32
    %81 = vector.broadcast %cst_38 : f32 to vector<8x128xf32>
    %82 = arith.maximumf %80, %81 : vector<8x128xf32>
    %c0_39 = arith.constant 0 : index
    %c0_40 = arith.constant 0 : index
    %83 = vector.load %arg7[%c0_39, %c0_40] : memref<128x64xf32, #tpu.memory_space<vmem>>, vector<128x64xf32>
    %cst_41 = arith.constant dense<0.000000e+00> : vector<8x64xf32>
    %84 = tpu.matmul %82, %83, %cst_41 {dimension_numbers = #tpu.dot_dimension_numbers<[1], [0], [0], [1], [0, 0, 1, 1], [], []>} : vector<8x128xf32>, vector<128x64xf32>, vector<8x64xf32> -> vector<8x64xf32>
    %c0_42 = arith.constant 0 : index
    %c0_43 = arith.constant 0 : index
    %85 = vector.load %arg8[%c0_42, %c0_43] : memref<1x64xf32, #tpu.memory_space<vmem>>, vector<1x64xf32>
    %86 = vector.broadcast %85 : vector<1x64xf32> to vector<8x64xf32>
    %87 = arith.addf %84, %86 : vector<8x64xf32>
    %88 = arith.addf %87, %28 : vector<8x64xf32>
    %cst_44 = arith.constant 0.000000e+00 : f32
    %89 = vector.broadcast %cst_44 : f32 to vector<8x64xf32>
    %90 = arith.maximumf %88, %89 : vector<8x64xf32>
    %c0_45 = arith.constant 0 : index
    %c0_46 = arith.constant 0 : index
    %c0_47 = arith.constant 0 : index
    %91 = vector.load %arg11[%c0_45, %c0_46, %c0_47] : memref<1x8x64xf32, #tpu.memory_space<vmem>>, vector<1x8x64xf32>
    %92 = vector.shape_cast %91 : vector<1x8x64xf32> to vector<8x64xf32>
    %93 = vector.shape_cast %90 : vector<8x64xf32> to vector<1x8x64xf32>
    tpu.vector_store %arg11[%c0_45, %c0_46, %c0_47], %93 {strides = array<i32>} : memref<1x8x64xf32, #tpu.memory_space<vmem>>, vector<1x8x64xf32>,
    return
  }
  func.func @transform_0(%arg0: i32) -> (i32, i32, i32) {
    %c0_i32 = arith.constant 0 : i32
    %c0_i32_0 = arith.constant 0 : i32
    %c0_i32_1 = arith.constant 0 : i32
    return %arg0, %c0_i32, %c0_i32_0 : i32, i32, i32
  }
  func.func @transform_1(%arg0: i32) -> (i32, i32, i32) {
    %c0_i32 = arith.constant 0 : i32
    %c0_i32_0 = arith.constant 0 : i32
    %c0_i32_1 = arith.constant 0 : i32
    return %arg0, %c0_i32, %c0_i32_0 : i32, i32, i32
  }
  func.func @transform_2(%arg0: i32) -> (i32, i32) {
    %c0_i32 = arith.constant 0 : i32
    %c0_i32_0 = arith.constant 0 : i32
    %c0_i32_1 = arith.constant 0 : i32
    return %c0_i32, %c0_i32_0 : i32, i32
  }
  func.func @transform_3(%arg0: i32) -> (i32, i32) {
    %c0_i32 = arith.constant 0 : i32
    %c0_i32_0 = arith.constant 0 : i32
    %c0_i32_1 = arith.constant 0 : i32
    return %c0_i32, %c0_i32_0 : i32, i32
  }
  func.func @transform_4(%arg0: i32) -> (i32, i32) {
    %c0_i32 = arith.constant 0 : i32
    %c0_i32_0 = arith.constant 0 : i32
    %c0_i32_1 = arith.constant 0 : i32
    return %c0_i32, %c0_i32_0 : i32, i32
  }
  func.func @transform_5(%arg0: i32) -> (i32, i32) {
    %c0_i32 = arith.constant 0 : i32
    %c0_i32_0 = arith.constant 0 : i32
    %c0_i32_1 = arith.constant 0 : i32
    return %c0_i32, %c0_i32_0 : i32, i32
  }
  func.func @transform_6(%arg0: i32) -> (i32, i32) {
    %c0_i32 = arith.constant 0 : i32
    %c0_i32_0 = arith.constant 0 : i32
    %c0_i32_1 = arith.constant 0 : i32
    return %c0_i32, %c0_i32_0 : i32, i32
  }
  func.func @transform_7(%arg0: i32) -> (i32, i32) {
    %c0_i32 = arith.constant 0 : i32
    %c0_i32_0 = arith.constant 0 : i32
    %c0_i32_1 = arith.constant 0 : i32
    return %c0_i32, %c0_i32_0 : i32, i32
  }
  func.func @transform_8(%arg0: i32) -> (i32, i32) {
    %c0_i32 = arith.constant 0 : i32
    %c0_i32_0 = arith.constant 0 : i32
    %c0_i32_1 = arith.constant 0 : i32
    return %c0_i32, %c0_i32_0 : i32, i32
  }
  func.func @transform_9(%arg0: i32) -> (i32, i32) {
    %c0_i32 = arith.constant 0 : i32
    %c0_i32_0 = arith.constant 0 : i32
    %c0_i32_1 = arith.constant 0 : i32
    return %c0_i32, %c0_i32_0 : i32, i32
  }
  func.func @transform_10(%arg0: i32) -> (i32, i32, i32) {
    %c0_i32 = arith.constant 0 : i32
    %c0_i32_0 = arith.constant 0 : i32
    %c0_i32_1 = arith.constant 0 : i32
    return %arg0, %c0_i32, %c0_i32_0 : i32, i32, i32
  }
}

</mosaic_0001>

<llo_original>
// kernel: tile.8
$region0: #{tile.8}
  #allocation0 [shape = 's32[1]{0}', space=sflag, size = 0x4, scoped, tag = 'scoped memory for tile.8']
  %s0 = inlined_call_operand.vmem [shape: f32[8], index: 0, kind: input, shape index: {}]
  %s1 = inlined_call_operand.vmem [shape: f32[16,8], index: 1, kind: output, shape index: {}]
  // Predicated region
  $region2: #{tile.8} parent=0 // pred_check
    _
  $region3: #{tile.8} parent=0 // pred_check_branch
    %3 = sbr.rel (0) target = $region5
  $region4: #{tile.8} parent=0 // pred_region
    _
  $region5: #{tile.8} parent=0 // pred_fallthru
    _
  %v4 = vld [vmem:[%s0] ss:$0 sm:$0xff]
  %5 = vst [vmem:[%s1] sm:$0xff] %v4
  %s6 = scalar_lea.vmem %s1, 8
  %7 = vst [vmem:[%s6] sm:$0xff] %v4

// kernel: tile.9
$region0: #{tile.9}
  %s0 = inlined_call_operand.vmem [shape: f32[16,8], index: 0, kind: input, shape index: {}]
  %s1 = inlined_call_operand.vmem [shape: f32[1,128], index: 1, kind: output, shape index: {}]
  $region1: #{tile.9} parent=0
    #allocation0 [shape = 'u8[4096]{0}', space=vmem, size = 0x1000, scoped, tag = 'scoped mem for output reshape']
    %v2 = vld [vmem:[%s0] sm:$0x1]
    %vm3 = vcmask 64512
    %4 = vst.msk [vmem:[#allocation0] sm:$0x1] %vm3, %v2
    %s5 = scalar_lea.vmem %s0, 15
    %v6 = vld [vmem:[%s5] sm:$0x1]
    %7 = vrot.lane.b32.xlu0 %v6, 120
    %v8 = vpop.permute.xlu0 %7
    %vm9 = vcmask 1048512
    %10 = vst.msk [vmem:[#allocation0] sm:$0x1] %vm9, %v8
    %s11 = scalar_lea.vmem %s0, 14
    %v12 = vld [vmem:[%s11] sm:$0x1]
    %13 = vrot.lane.b32.xlu0 %v12, 112
    %v14 = vpop.permute.xlu0 %13
    %vm15 = vcmask 982912
    %16 = vst.msk [vmem:[#allocation0] sm:$0x1] %vm15, %v14
    %s17 = scalar_lea.vmem %s0, 13
    %v18 = vld [vmem:[%s17] sm:$0x1]
    %19 = vrot.lane.b32.xlu0 %v18, 104
    %v20 = vpop.permute.xlu0 %19
    %vm21 = vcmask 917312
    %22 = vst.msk [vmem:[#allocation0] sm:$0x1] %vm21, %v20
    %s23 = scalar_lea.vmem %s0, 12
    %v24 = vld [vmem:[%s23] sm:$0x1]
    %25 = vrot.lane.b32.xlu0 %v24, 96
    %v26 = vpop.permute.xlu0 %25
    %vm27 = vcmask 851712
    %28 = vst.msk [vmem:[#allocation0] sm:$0x1] %vm27, %v26
    %s29 = scalar_lea.vmem %s0, 11
    %v30 = vld [vmem:[%s29] sm:$0x1]
    %31 = vrot.lane.b32.xlu0 %v30, 88
    %v32 = vpop.permute.xlu0 %31
    %vm33 = vcmask 786112
    %34 = vst.msk [vmem:[#allocation0] sm:$0x1] %vm33, %v32
    %s35 = scalar_lea.vmem %s0, 10
    %v36 = vld [vmem:[%s35] sm:$0x1]
    %37 = vrot.lane.b32.xlu0 %v36, 80
    %v38 = vpop.permute.xlu0 %37
    %vm39 = vcmask 720512
    %40 = vst.msk [vmem:[#allocation0] sm:$0x1] %vm39, %v38
    %s41 = scalar_lea.vmem %s0, 9
    %v42 = vld [vmem:[%s41] sm:$0x1]
    %43 = vrot.lane.b32.xlu0 %v42, 72
    %v44 = vpop.permute.xlu0 %43
    %vm45 = vcmask 654912
    %46 = vst.msk [vmem:[#allocation0] sm:$0x1] %vm45, %v44
    %s47 = scalar_lea.vmem %s0, 8
    %v48 = vld [vmem:[%s47] sm:$0x1]
    %49 = vrot.lane.b32.xlu0 %v48, 64
    %v50 = vpop.permute.xlu0 %49
    %vm51 = vcmask 589312
    %52 = vst.msk [vmem:[#allocation0] sm:$0x1] %vm51, %v50
    %s53 = scalar_lea.vmem %s0, 7
    %v54 = vld [vmem:[%s53] sm:$0x1]
    %55 = vrot.lane.b32.xlu0 %v54, 56
    %v56 = vpop.permute.xlu0 %55
    %vm57 = vcmask 523712
    %58 = vst.msk [vmem:[#allocation0] sm:$0x1] %vm57, %v56
    %s59 = scalar_lea.vmem %s0, 6
    %v60 = vld [vmem:[%s59] sm:$0x1]
    %61 = vrot.lane.b32.xlu0 %v60, 48
    %v62 = vpop.permute.xlu0 %61
    %vm63 = vcmask 458112
    %64 = vst.msk [vmem:[#allocation0] sm:$0x1] %vm63, %v62
    %s65 = scalar_lea.vmem %s0, 5
    %v66 = vld [vmem:[%s65] sm:$0x1]
    %67 = vrot.lane.b32.xlu0 %v66, 40
    %v68 = vpop.permute.xlu0 %67
    %vm69 = vcmask 392512
    %70 = vst.msk [vmem:[#allocation0] sm:$0x1] %vm69, %v68
    %s71 = scalar_lea.vmem %s0, 4
    %v72 = vld [vmem:[%s71] sm:$0x1]
    %73 = vrot.lane.b32.xlu0 %v72, 32
    %v74 = vpop.permute.xlu0 %73
    %vm75 = vcmask 326912
    %76 = vst.msk [vmem:[#allocation0] sm:$0x1] %vm75, %v74
    %s77 = scalar_lea.vmem %s0, 3
    %v78 = vld [vmem:[%s77] sm:$0x1]
    %79 = vrot.lane.b32.xlu0 %v78, 24
    %v80 = vpop.permute.xlu0 %79
    %vm81 = vcmask 261312
    %82 = vst.msk [vmem:[#allocation0] sm:$0x1] %vm81, %v80
    %s83 = scalar_lea.vmem %s0, 2
    %v84 = vld [vmem:[%s83] sm:$0x1]
    %85 = vrot.lane.b32.xlu0 %v84, 16
    %v86 = vpop.permute.xlu0 %85
    %vm87 = vcmask 195712
    %88 = vst.msk [vmem:[#allocation0] sm:$0x1] %vm87, %v86
    %s89 = scalar_lea.vmem %s0, 1
    %v90 = vld [vmem:[%s89] sm:$0x1]
    %91 = vrot.lane.b32.xlu0 %v90, 8
    %v92 = vpop.permute.xlu0 %91
    %vm93 = vcmask 130112
    %94 = vst.msk [vmem:[#allocation0] sm:$0x1] %vm93, %v92
    %s96 = ssub.s32 2, 1
    %v97 = vld [vmem:[#allocation0] sm:%s96]
    %s99 = ssub.s32 2, 1
    %100 = vst [vmem:[%s1] sm:%s99] %v97

// kernel: cube_downsample_v2_forward.1
$region0: #{cube_downsample_v2_forward.1}
  #allocation0 [shape = 'u32[]', space=smem, size = 0x4, offset = 0x4, fixed_abs, tag = 'smem constant byte address 0x4 - core index']
  #allocation1 [shape = 'u32[72,128]{1,0:T(1,128)}', space=vmem, size = 0x9000, scoped, tag = 'internal scratch']
  %s0 = inlined_call_operand.vmem [shape: f32[2,16,256], index: 0, kind: input, shape index: {}]
  %s1 = inlined_call_operand.vmem [shape: f32[2,64,64], index: 1, kind: input, shape index: {}]
  %s2 = inlined_call_operand.vmem [shape: f32[8,16], index: 2, kind: input, shape index: {}]
  %s3 = inlined_call_operand.vmem [shape: f32[8,1], index: 3, kind: input, shape index: {}]
  %s4 = inlined_call_operand.vmem [shape: f32[256,128], index: 4, kind: input, shape index: {}]
  %s5 = inlined_call_operand.vmem [shape: f32[1,128], index: 5, kind: input, shape index: {}]
  %s6 = inlined_call_operand.vmem [shape: f32[128,64], index: 6, kind: input, shape index: {}]
  %s7 = inlined_call_operand.vmem [shape: f32[1,64], index: 7, kind: input, shape index: {}]
  %s8 = inlined_call_operand.vmem [shape: f32[8,64], index: 8, kind: input, shape index: {}]
  %s9 = inlined_call_operand.vmem [shape: f32[8,1], index: 9, kind: input, shape index: {}]
  %s10 = inlined_call_operand.vmem [shape: f32[2,8,64], index: 10, kind: output, shape index: {}]
  %s11 = sld [smem:[#allocation0]]
  $region73: #{cube_downsample_v2_forward.1} parent=0
    _
  %s13 = ssub.s32 1, %s11
  %s14 = scalar_select 0, %s13, %s11
  loop: start=0, step=1, limit=4
  $region2: #{cube_downsample_v2_forward.1} parent=0 // loop_pre_header
    _
  $region3: #{cube_downsample_v2_forward.1} parent=0 // loop_header
    %s16 = sphi 0, %s20
    %p17 = scmp.ge.s32.totalorder %s16, 4
    %s26 = sphi 0, %s28
    %s29 = sphi 0, %s26
    %s30 = sphi 0, %s29
    %s46 = sphi 0, %s30
    %s52 = sphi 0, %s54
    %s55 = sphi 0, %s52
    %s56 = sphi 0, %s55
    %s72 = sphi 0, %s56
    %s76 = sphi 0, %s76
    %s78 = sphi 0, %s76
    %s79 = sphi 0, %s78
    %s93 = sphi 0, %s79
    %s97 = sphi 0, %s97
    %s99 = sphi 0, %s97
    %s100 = sphi 0, %s99
    %s114 = sphi 0, %s100
    %s118 = sphi 0, %s118
    %s120 = sphi 0, %s118
    %s121 = sphi 0, %s120
    %s135 = sphi 0, %s121
    %s139 = sphi 0, %s139
    %s141 = sphi 0, %s139
    %s142 = sphi 0, %s141
    %s156 = sphi 0, %s142
    %s160 = sphi 0, %s160
    %s162 = sphi 0, %s160
    %s163 = sphi 0, %s162
    %s177 = sphi 0, %s163
    %s181 = sphi 0, %s181
    %s183 = sphi 0, %s181
    %s184 = sphi 0, %s183
    %s198 = sphi 0, %s184
    %s202 = sphi 0, %s202
    %s204 = sphi 0, %s202
    %s205 = sphi 0, %s204
    %s219 = sphi 0, %s205
    %s223 = sphi 0, %s223
    %s225 = sphi 0, %s223
    %s226 = sphi 0, %s225
    %s240 = sphi 0, %s226
    %s246 = sphi 0, %s248
    %s249 = sphi 0, %s246
    %s250 = sphi 0, %s249
    %s266 = sphi 0, %s250
  $region4: #{cube_downsample_v2_forward.1} parent=0 // loop_header_branch
    %19 = sbr.rel (%p17) target = $region8
  $region5: #{cube_downsample_v2_forward.1} parent=0 // loop_body
    %s21 = ssub.s32 %s16, 1
    %s22 = ssub.s32 %s16, 2
    %s23 = sadd.s32 %s16, 1
    %s24 = ssub.s32 %s16, %s23
    %p25 = scmp.eq.s32.totalorder %s24, 0
    %s27 = sadd.s32 %s26, 1
    %s28 = scalar_select %p25, %s26, %s27
    %p31 = pneg %p25
    %p32 = scmp.eq.s32.totalorder %s16, 1
    %p33 = por %p31, %p32
    %p34 = scmp.ne.s32.totalorder %s26, %s29
    %p35 = scmp.eq.s32.totalorder %s16, 0
    %p36 = por %p34, %p35
    %p37 = scmp.ne.s32.totalorder %s26, %s29
    %p38 = scmp.eq.s32.totalorder %s21, 1
    %p39 = por %p37, %p38
    %p40 = scmp.ne.s32.totalorder %s29, %s30
    %p41 = scmp.eq.s32.totalorder %s21, 0
    %p42 = por %p40, %p41
    %p43 = scmp.ne.s32.totalorder %s29, %s30
    %p44 = scmp.eq.s32.totalorder %s22, 1
    %p45 = por %p43, %p44
    %p47 = scmp.ne.s32.totalorder %s30, %s46
    %p48 = scmp.eq.s32.totalorder %s22, 0
    %p49 = por %p47, %p48
    %s50 = ssub.s32 %s16, %s23
    %p51 = scmp.eq.s32.totalorder %s50, 0
    %s53 = sadd.s32 %s52, 1
    %s54 = scalar_select %p51, %s52, %s53
    %p57 = pneg %p51
    %p58 = scmp.eq.s32.totalorder %s16, 1
    %p59 = por %p57, %p58
    %p60 = scmp.ne.s32.totalorder %s52, %s55
    %p61 = scmp.eq.s32.totalorder %s16, 0
    %p62 = por %p60, %p61
    %p63 = scmp.ne.s32.totalorder %s52, %s55
    %p64 = scmp.eq.s32.totalorder %s21, 1
    %p65 = por %p63, %p64
    %p66 = scmp.ne.s32.totalorder %s55, %s56
    %p67 = scmp.eq.s32.totalorder %s21, 0
    %p68 = por %p66, %p67
    %p69 = scmp.ne.s32.totalorder %s55, %s56
    %p70 = scmp.eq.s32.totalorder %s22, 1
    %p71 = por %p69, %p70
    %p73 = scmp.ne.s32.totalorder %s56, %s72
    %p74 = scmp.eq.s32.totalorder %s22, 0
    %p75 = por %p73, %p74
    %s77 = sadd.s32 %s76, 1
    %p80 = scmp.eq.s32.totalorder %s16, 1
    %p81 = scmp.ne.s32.totalorder %s76, %s78
    %p82 = scmp.eq.s32.totalorder %s16, 0
    %p83 = por %p81, %p82
    %p84 = scmp.ne.s32.totalorder %s76, %s78
    %p85 = scmp.eq.s32.totalorder %s21, 1
    %p86 = por %p84, %p85
    %p87 = scmp.ne.s32.totalorder %s78, %s79
    %p88 = scmp.eq.s32.totalorder %s21, 0
    %p89 = por %p87, %p88
    %p90 = scmp.ne.s32.totalorder %s78, %s79
    %p91 = scmp.eq.s32.totalorder %s22, 1
    %p92 = por %p90, %p91
    %p94 = scmp.ne.s32.totalorder %s79, %s93
    %p95 = scmp.eq.s32.totalorder %s22, 0
    %p96 = por %p94, %p95
    %s98 = sadd.s32 %s97, 1
    %p101 = scmp.eq.s32.totalorder %s16, 1
    %p102 = scmp.ne.s32.totalorder %s97, %s99
    %p103 = scmp.eq.s32.totalorder %s16, 0
    %p104 = por %p102, %p103
    %p105 = scmp.ne.s32.totalorder %s97, %s99
    %p106 = scmp.eq.s32.totalorder %s21, 1
    %p107 = por %p105, %p106
    %p108 = scmp.ne.s32.totalorder %s99, %s100
    %p109 = scmp.eq.s32.totalorder %s21, 0
    %p110 = por %p108, %p109
    %p111 = scmp.ne.s32.totalorder %s99, %s100
    %p112 = scmp.eq.s32.totalorder %s22, 1
    %p113 = por %p111, %p112
    %p115 = scmp.ne.s32.totalorder %s100, %s114
    %p116 = scmp.eq.s32.totalorder %s22, 0
    %p117 = por %p115, %p116
    %s119 = sadd.s32 %s118, 1
    %p122 = scmp.eq.s32.totalorder %s16, 1
    %p123 = scmp.ne.s32.totalorder %s118, %s120
    %p124 = scmp.eq.s32.totalorder %s16, 0
    %p125 = por %p123, %p124
    %p126 = scmp.ne.s32.totalorder %s118, %s120
    %p127 = scmp.eq.s32.totalorder %s21, 1
    %p128 = por %p126, %p127
    %p129 = scmp.ne.s32.totalorder %s120, %s121
    %p130 = scmp.eq.s32.totalorder %s21, 0
    %p131 = por %p129, %p130
    %p132 = scmp.ne.s32.totalorder %s120, %s121
    %p133 = scmp.eq.s32.totalorder %s22, 1
    %p134 = por %p132, %p133
    %p136 = scmp.ne.s32.totalorder %s121, %s135
    %p137 = scmp.eq.s32.totalorder %s22, 0
    %p138 = por %p136, %p137
    %s140 = sadd.s32 %s139, 1
    %p143 = scmp.eq.s32.totalorder %s16, 1
    %p144 = scmp.ne.s32.totalorder %s139, %s141
    %p145 = scmp.eq.s32.totalorder %s16, 0
    %p146 = por %p144, %p145
    %p147 = scmp.ne.s32.totalorder %s139, %s141
    %p148 = scmp.eq.s32.totalorder %s21, 1
    %p149 = por %p147, %p148
    %p150 = scmp.ne.s32.totalorder %s141, %s142
    %p151 = scmp.eq.s32.totalorder %s21, 0
    %p152 = por %p150, %p151
    %p153 = scmp.ne.s32.totalorder %s141, %s142
    %p154 = scmp.eq.s32.totalorder %s22, 1
    %p155 = por %p153, %p154
    %p157 = scmp.ne.s32.totalorder %s142, %s156
    %p158 = scmp.eq.s32.totalorder %s22, 0
    %p159 = por %p157, %p158
    %s161 = sadd.s32 %s160, 1
    %p164 = scmp.eq.s32.totalorder %s16, 1
    %p165 = scmp.ne.s32.totalorder %s160, %s162
    %p166 = scmp.eq.s32.totalorder %s16, 0
    %p167 = por %p165, %p166
    %p168 = scmp.ne.s32.totalorder %s160, %s162
    %p169 = scmp.eq.s32.totalorder %s21, 1
    %p170 = por %p168, %p169
    %p171 = scmp.ne.s32.totalorder %s162, %s163
    %p172 = scmp.eq.s32.totalorder %s21, 0
    %p173 = por %p171, %p172
    %p174 = scmp.ne.s32.totalorder %s162, %s163
    %p175 = scmp.eq.s32.totalorder %s22, 1
    %p176 = por %p174, %p175
    %p178 = scmp.ne.s32.totalorder %s163, %s177
    %p179 = scmp.eq.s32.totalorder %s22, 0
    %p180 = por %p178, %p179
    %s182 = sadd.s32 %s181, 1
    %p185 = scmp.eq.s32.totalorder %s16, 1
    %p186 = scmp.ne.s32.totalorder %s181, %s183
    %p187 = scmp.eq.s32.totalorder %s16, 0
    %p188 = por %p186, %p187
    %p189 = scmp.ne.s32.totalorder %s181, %s183
    %p190 = scmp.eq.s32.totalorder %s21, 1
    %p191 = por %p189, %p190
    %p192 = scmp.ne.s32.totalorder %s183, %s184
    %p193 = scmp.eq.s32.totalorder %s21, 0
    %p194 = por %p192, %p193
    %p195 = scmp.ne.s32.totalorder %s183, %s184
    %p196 = scmp.eq.s32.totalorder %s22, 1
    %p197 = por %p195, %p196
    %p199 = scmp.ne.s32.totalorder %s184, %s198
    %p200 = scmp.eq.s32.totalorder %s22, 0
    %p201 = por %p199, %p200
    %s203 = sadd.s32 %s202, 1
    %p206 = scmp.eq.s32.totalorder %s16, 1
    %p207 = scmp.ne.s32.totalorder %s202, %s204
    %p208 = scmp.eq.s32.totalorder %s16, 0
    %p209 = por %p207, %p208
    %p210 = scmp.ne.s32.totalorder %s202, %s204
    %p211 = scmp.eq.s32.totalorder %s21, 1
    %p212 = por %p210, %p211
    %p213 = scmp.ne.s32.totalorder %s204, %s205
    %p214 = scmp.eq.s32.totalorder %s21, 0
    %p215 = por %p213, %p214
    %p216 = scmp.ne.s32.totalorder %s204, %s205
    %p217 = scmp.eq.s32.totalorder %s22, 1
    %p218 = por %p216, %p217
    %p220 = scmp.ne.s32.totalorder %s205, %s219
    %p221 = scmp.eq.s32.totalorder %s22, 0
    %p222 = por %p220, %p221
    %s224 = sadd.s32 %s223, 1
    %p227 = scmp.eq.s32.totalorder %s16, 1
    %p228 = scmp.ne.s32.totalorder %s223, %s225
    %p229 = scmp.eq.s32.totalorder %s16, 0
    %p230 = por %p228, %p229
    %p231 = scmp.ne.s32.totalorder %s223, %s225
    %p232 = scmp.eq.s32.totalorder %s21, 1
    %p233 = por %p231, %p232
    %p234 = scmp.ne.s32.totalorder %s225, %s226
    %p235 = scmp.eq.s32.totalorder %s21, 0
    %p236 = por %p234, %p235
    %p237 = scmp.ne.s32.totalorder %s225, %s226
    %p238 = scmp.eq.s32.totalorder %s22, 1
    %p239 = por %p237, %p238
    %p241 = scmp.ne.s32.totalorder %s226, %s240
    %p242 = scmp.eq.s32.totalorder %s22, 0
    %p243 = por %p241, %p242
    %s244 = ssub.s32 %s16, %s23
    %p245 = scmp.eq.s32.totalorder %s244, 0
    %s247 = sadd.s32 %s246, 1
    %s248 = scalar_select %p245, %s246, %s247
    %p251 = pneg %p245
    %p252 = scmp.eq.s32.totalorder %s16, 1
    %p253 = por %p251, %p252
    %p254 = scmp.ne.s32.totalorder %s246, %s249
    %p255 = scmp.eq.s32.totalorder %s16, 0
    %p256 = por %p254, %p255
    %p257 = scmp.ne.s32.totalorder %s246, %s249
    %p258 = scmp.eq.s32.totalorder %s21, 1
    %p259 = por %p257, %p258
    %p260 = scmp.ne.s32.totalorder %s249, %s250
    %p261 = scmp.eq.s32.totalorder %s21, 0
    %p262 = por %p260, %p261
    %p263 = scmp.ne.s32.totalorder %s249, %s250
    %p264 = scmp.eq.s32.totalorder %s22, 1
    %p265 = por %p263, %p264
    %p267 = scmp.ne.s32.totalorder %s250, %s266
    %p268 = scmp.eq.s32.totalorder %s22, 0
    %p269 = por %p267, %p268
    %p270 = scmp.le.s32.totalorder 1, %s16
    %p271 = scmp.lt.s32.totalorder %s16, 3
    %p272 = pnand %p270, %p271
    %p273 = pneg %p272
    // Predicated region
    $region9: #{cube_downsample_v2_forward.1} parent=5 // pred_check
      _
    $region10: #{cube_downsample_v2_forward.1} parent=5 // pred_check_branch
      %275 = sbr.rel (%p272) target = $region12
    $region11: #{cube_downsample_v2_forward.1} parent=5 // pred_region
      %s276 = ssub.s32 %s16, 1
      // Predicated region
      $region13: #{cube_downsample_v2_forward.1} parent=11 // pred_check
        %p277 = pneg %p89
      $region14: #{cube_downsample_v2_forward.1} parent=11 // pred_check_branch
        %279 = sbr.rel (%p277) target = $region16
      $region15: #{cube_downsample_v2_forward.1} parent=11 // pred_region
        _
      $region16: #{cube_downsample_v2_forward.1} parent=11 // pred_fallthru
        _
      // Predicated region
      $region17: #{cube_downsample_v2_forward.1} parent=11 // pred_check
        %p280 = pneg %p110
      $region18: #{cube_downsample_v2_forward.1} parent=11 // pred_check_branch
        %282 = sbr.rel (%p280) target = $region20
      $region19: #{cube_downsample_v2_forward.1} parent=11 // pred_region
        _
      $region20: #{cube_downsample_v2_forward.1} parent=11 // pred_fallthru
        _
      // Predicated region
      $region21: #{cube_downsample_v2_forward.1} parent=11 // pred_check
        %p283 = pneg %p131
      $region22: #{cube_downsample_v2_forward.1} parent=11 // pred_check_branch
        %285 = sbr.rel (%p283) target = $region24
      $region23: #{cube_downsample_v2_forward.1} parent=11 // pred_region
        _
      $region24: #{cube_downsample_v2_forward.1} parent=11 // pred_fallthru
        _
      // Predicated region
      $region25: #{cube_downsample_v2_forward.1} parent=11 // pred_check
        %p286 = pneg %p152
      $region26: #{cube_downsample_v2_forward.1} parent=11 // pred_check_branch
        %288 = sbr.rel (%p286) target = $region28
      $region27: #{cube_downsample_v2_forward.1} parent=11 // pred_region
        _
      $region28: #{cube_downsample_v2_forward.1} parent=11 // pred_fallthru
        _
      // Predicated region
      $region29: #{cube_downsample_v2_forward.1} parent=11 // pred_check
        %p289 = pneg %p173
      $region30: #{cube_downsample_v2_forward.1} parent=11 // pred_check_branch
        %291 = sbr.rel (%p289) target = $region32
      $region31: #{cube_downsample_v2_forward.1} parent=11 // pred_region
        _
      $region32: #{cube_downsample_v2_forward.1} parent=11 // pred_fallthru
        _
      // Predicated region
      $region33: #{cube_downsample_v2_forward.1} parent=11 // pred_check
        %p292 = pneg %p194
      $region34: #{cube_downsample_v2_forward.1} parent=11 // pred_check_branch
        %294 = sbr.rel (%p292) target = $region36
      $region35: #{cube_downsample_v2_forward.1} parent=11 // pred_region
        _
      $region36: #{cube_downsample_v2_forward.1} parent=11 // pred_fallthru
        _
      // Predicated region
      $region37: #{cube_downsample_v2_forward.1} parent=11 // pred_check
        %p295 = pneg %p215
      $region38: #{cube_downsample_v2_forward.1} parent=11 // pred_check_branch
        %297 = sbr.rel (%p295) target = $region40
      $region39: #{cube_downsample_v2_forward.1} parent=11 // pred_region
        _
      $region40: #{cube_downsample_v2_forward.1} parent=11 // pred_fallthru
        _
      // Predicated region
      $region41: #{cube_downsample_v2_forward.1} parent=11 // pred_check
        %p298 = pneg %p236
      $region42: #{cube_downsample_v2_forward.1} parent=11 // pred_check_branch
        %300 = sbr.rel (%p298) target = $region44
      $region43: #{cube_downsample_v2_forward.1} parent=11 // pred_region
        _
      $region44: #{cube_downsample_v2_forward.1} parent=11 // pred_fallthru
        _
    $region12: #{cube_downsample_v2_forward.1} parent=5 // pred_fallthru
      _
    %p301 = scmp.lt.s32.totalorder %s16, 2
    // Predicated region
    $region45: #{cube_downsample_v2_forward.1} parent=5 // pred_check
      %p302 = pneg %p301
    $region46: #{cube_downsample_v2_forward.1} parent=5 // pred_check_branch
      %304 = sbr.rel (%p302) target = $region48
    $region47: #{cube_downsample_v2_forward.1} parent=5 // pred_region
      // Predicated region
      $region49: #{cube_downsample_v2_forward.1} parent=47 // pred_check
        %p305 = pneg %p36
      $region50: #{cube_downsample_v2_forward.1} parent=47 // pred_check_branch
        %307 = sbr.rel (%p305) target = $region52
      $region51: #{cube_downsample_v2_forward.1} parent=47 // pred_region
        %p308 = scmp.lt.s32.totalorder %s16, 1
        %s309 = scalar_select %p308, %s16, 1
        %s310 = smul.addr %s309, 4
        %s311 = smul.addr %s310, 8
        %s312 = scalar_lea.vmem %s0, %s311
      $region52: #{cube_downsample_v2_forward.1} parent=47 // pred_fallthru
        _
      // Predicated region
      $region53: #{cube_downsample_v2_forward.1} parent=47 // pred_check
        %p313 = pneg %p62
      $region54: #{cube_downsample_v2_forward.1} parent=47 // pred_check_branch
        %315 = sbr.rel (%p313) target = $region56
      $region55: #{cube_downsample_v2_forward.1} parent=47 // pred_region
        %p316 = scmp.lt.s32.totalorder %s16, 1
        %s317 = scalar_select %p316, %s16, 1
        %s318 = smul.addr %s317, 8
        %s319 = smul.addr %s318, 8
        %s320 = scalar_lea.vmem %s1, %s319
      $region56: #{cube_downsample_v2_forward.1} parent=47 // pred_fallthru
        _
    $region48: #{cube_downsample_v2_forward.1} parent=5 // pred_fallthru
      _
    %p321 = scmp.le.s32.totalorder 1, %s16
    %p322 = scmp.lt.s32.totalorder %s16, 3
    %p323 = pnand %p321, %p322
    %p324 = pneg %p323
    // Predicated region
    $region57: #{cube_downsample_v2_forward.1} parent=5 // pred_check
      _
    $region58: #{cube_downsample_v2_forward.1} parent=5 // pred_check_branch
      %326 = sbr.rel (%p323) target = $region60
    $region59: #{cube_downsample_v2_forward.1} parent=5 // pred_region
      %s327 = ssub.s32 %s16, 1
      %p328 = scmp.lt.s32.totalorder %s21, 1
      %s329 = scalar_select %p328, %s21, 1
      %s330 = smul.addr %s329, 4
      %s331 = smul.addr %s330, 8
      %s332 = scalar_lea.vmem %s0, %s331
      %p333 = pneg %p42
      %p334 = pneg %p39
      %p335 = scmp.lt.s32.totalorder %s21, 1
      %s336 = scalar_select %p335, %s21, 1
      %s337 = smul.addr %s336, 8
      %s338 = smul.addr %s337, 8
      %s339 = scalar_lea.vmem %s1, %s338
      %p340 = pneg %p68
      %p341 = pneg %p65
      %p342 = pneg %p89
      %p343 = pneg %p86
      %p344 = pneg %p110
      %p345 = pneg %p107
      %p346 = pneg %p131
      %p347 = pneg %p128
      %p348 = pneg %p152
      %p349 = pneg %p149
      %p350 = pneg %p173
      %p351 = pneg %p170
      %p352 = pneg %p194
      %p353 = pneg %p191
      %p354 = pneg %p215
      %p355 = pneg %p212
      %p356 = pneg %p236
      %p357 = pneg %p233
      %p358 = pneg %p262
      %p359 = pneg %p259
      %p360 = scmp.lt.s32.totalorder %s21, 1
      %s361 = scalar_select %p360, %s21, 1
      %s362 = smul.addr %s361, 8
      %s363 = scalar_lea.vmem %s10, %s362
      %p364 = scmp.lt.s32.totalorder %s21, 1
      %s365 = scalar_select %p364, %s21, 1
      %s366 = smul.addr %s365, 4
      %s367 = smul.addr %s366, 8
      %s368 = scalar_lea.vmem %s0, %s367
      %p369 = scmp.lt.s32.totalorder %s21, 1
      %s370 = scalar_select %p369, %s21, 1
      %s371 = smul.addr %s370, 8
      %s372 = smul.addr %s371, 8
      %s373 = scalar_lea.vmem %s1, %s372
      %p374 = scmp.lt.s32.totalorder %s21, 1
      %s375 = scalar_select %p374, %s21, 1
      %s376 = smul.addr %s375, 8
      %s377 = scalar_lea.vmem %s10, %s376
      %v378 = vld [vmem:[%s368] sm:$0xff]
      %v379 = vld [vmem:[%s368 + $0x8] sm:$0xff]
      %v380 = vld [vmem:[%s368 + $0x10] sm:$0xff]
      %v381 = vld [vmem:[%s368 + $0x18] sm:$0xff]
      %v382 = vld [vmem:[%s373] sm:$0xff]
      %v383 = vld [vmem:[%s373 + $0x8] sm:$0xff]
      %v384 = vld [vmem:[%s373 + $0x10] sm:$0xff]
      %v385 = vld [vmem:[%s373 + $0x18] sm:$0xff]
      %v386 = vld [vmem:[%s373 + $0x20] sm:$0xff]
      %v387 = vld [vmem:[%s373 + $0x28] sm:$0xff]
      %v388 = vld [vmem:[%s373 + $0x30] sm:$0xff]
      %v389 = vld [vmem:[%s373 + $0x38] sm:$0xff]
      %v390 = vld [vmem:[%s8] sm:$0xff]
      %v391 = vld [vmem:[%s9] sm:$0xff]
      %393 = vset.pattern.permute.xlu0 0
      %394 = vperm.xlu0 %393, %v391
      %v395 = vpop.permute.xlu0 %394
      %vm397 = vcmask 523264
      %v399 = vsel %vm397, %v390, 0
      %401 = vmatpush.msra.mxu0 0.0
      %402 = vmatpush.msra.mxu0 0.0
      %403 = vmatpush.msra.mxu0 0.0
      %404 = vmatpush.msra.mxu0 0.0
      %405 = vmatpush.msra.mxu0 0.0
      %406 = vmatpush.msra.mxu0 0.0
      %407 = vmatpush.msra.mxu0 0.0
      %408 = vmatpush.msra.mxu0 0.0
      %409 = vmatpush.msra.mxu0 %v389
      %410 = vmatpush.msra.mxu0 %v388
      %411 = vmatpush.msra.mxu0 %v387
      %412 = vmatpush.msra.mxu0 %v386
      %413 = vmatpush.msra.mxu0 %v385
      %414 = vmatpush.msra.mxu0 %v384
      %415 = vmatpush.msra.mxu0 %v383
      %416 = vmatpush.msra.mxu0 %v382
      %417 = vmatmul.f32.gmra.mxu0 %v399
      %v418 = vpop.f32.mrf.mxu0
      %v419 = vadd.f32 %v395, %v418
      %420 = vdwg.mxu0
      %v421 = vsel %vm397, %v419, 0.0
      %422 = vadd.xlane.f32.xlu0 %v421
      %v423 = vpop.xlane.xlu0 %422
      %v424 = vrot.slane %v423, 4
      %v425 = vadd.f32 %v423, %v424
      %v426 = vrot.slane %v425, 2
      %v427 = vadd.f32 %v425, %v426
      %v428 = vrot.slane %v427, 1
      %v429 = vadd.f32 %v427, %v428
      %s430 = vtos %v429
      %v431 = vmul.f32 %v419, %v419
      %v432 = vsel %vm397, %v431, 0.0
      %433 = vadd.xlane.f32.xlu0 %v432
      %v434 = vpop.xlane.xlu0 %433
      %v435 = vrot.slane %v434, 4
      %v436 = vadd.f32 %v434, %v435
      %v437 = vrot.slane %v436, 2
      %v438 = vadd.f32 %v436, %v437
      %v439 = vrot.slane %v438, 1
      %v440 = vadd.f32 %v438, %v439
      %s441 = vtos %v440
      %v442 = vrcp.pop 512.0
      %v443 = vmul.f32 512.0, %v442
      %v444 = vsub.f32 1.0, %v443
      %v445 = vmul.f32 %v442, %v444
      %v446 = vadd.f32 %v442, %v445
      %vm447 = vweird.f32 %v442
      %v448 = vsel %vm447, %v442, %v446
      %s449 = vtos %v448
      %s450 = smul.f32 %s430, %s449
      %s451 = smul.f32 %s450, 512.0
      %s452 = smul.f32 %s451, %s450
      %s453 = ssub.f32 %s441, %s452
      %v454 = vrcp.pop 511.0
      %v455 = vmul.f32 511.0, %v454
      %v456 = vsub.f32 1.0, %v455
      %v457 = vmul.f32 %v454, %v456
      %v458 = vadd.f32 %v454, %v457
      %vm459 = vweird.f32 %v454
      %v460 = vsel %vm459, %v454, %v458
      %s461 = vtos %v460
      %s462 = smul.f32 %s453, %s461
      %v463 = vstv %s450
      %v464 = vsub.f32 %v419, %v463
      %s465 = sadd.f32 %s462, 1e-05
      %v466 = vstv %s465
      %v467 = vrsqrt.pop %v466
      %v468 = vmul.f32 %v467, %v466
      %v469 = vmul.f32 %v468, %v467
      %v470 = vmul.f32 0.5, %v469
      %v471 = vsub.f32 1.5, %v470
      %v472 = vmul.f32 %v467, %v471
      %vm473 = vweird.f32 %v466
      %vm474 = vweird.f32 %v467
      %vm475 = vmor %vm473, %vm474
      %v476 = vsel %vm475, %v467, %v472
      %s477 = vtos %v476
      %v478 = vstv %s477
      %v479 = vmul.f32 %v464, %v478
      %v480 = vld [vmem:[%s2] sm:$0xff]
      %v481 = vld [vmem:[%s3] sm:$0xff]
      %483 = vset.pattern.permute.xlu0 0
      %484 = vperm.xlu0 %483, %v481
      %v485 = vpop.permute.xlu0 %484
      %vm487 = vcmask 130048
      %v489 = vsel %vm487, %v480, 0
      %491 = vmatpush.msra.mxu0 0.0
      %492 = vmatpush.msra.mxu0 0.0
      %493 = vmatpush.msra.mxu0 0.0
      %494 = vmatpush.msra.mxu0 0.0
      %495 = vmatpush.msra.mxu0 0.0
      %496 = vmatpush.msra.mxu0 0.0
      %497 = vmatpush.msra.mxu0 0.0
      %498 = vmatpush.msra.mxu0 0.0
      %499 = vmatpush.msra.mxu0 0.0
      %500 = vmatpush.msra.mxu0 0.0
      %501 = vmatpush.msra.mxu0 0.0
      %502 = vmatpush.msra.mxu0 0.0
      %503 = vmatpush.msra.mxu0 0.0
      %504 = vmatpush.msra.mxu0 0.0
      %505 = vmatpush.msra.mxu0 %v380
      %506 = vmatpush.msra.mxu0 %v378
      %507 = vmatmul.f32.gmra.mxu0 %v489
      %v508 = vpop.f32.mrf.mxu0
      %v509 = vadd.f32 %v485, %v508
      %510 = vdwg.mxu0
      %511 = vmatpush.msra.mxu0 0.0
      %512 = vmatpush.msra.mxu0 0.0
      %513 = vmatpush.msra.mxu0 0.0
      %514 = vmatpush.msra.mxu0 0.0
      %515 = vmatpush.msra.mxu0 0.0
      %516 = vmatpush.msra.mxu0 0.0
      %517 = vmatpush.msra.mxu0 0.0
      %518 = vmatpush.msra.mxu0 0.0
      %519 = vmatpush.msra.mxu0 0.0
      %520 = vmatpush.msra.mxu0 0.0
      %521 = vmatpush.msra.mxu0 0.0
      %522 = vmatpush.msra.mxu0 0.0
      %523 = vmatpush.msra.mxu0 0.0
      %524 = vmatpush.msra.mxu0 0.0
      %525 = vmatpush.msra.mxu0 %v381
      %526 = vmatpush.msra.mxu0 %v379
      %527 = vmatmul.f32.gmra.mxu0 %v489
      %v528 = vpop.f32.mrf.mxu0
      %v529 = vadd.f32 %v485, %v528
      %530 = vdwg.mxu0
      %v531 = vadd.f32 %v509, %v529
      %532 = vadd.xlane.f32.xlu0 %v531
      %v533 = vpop.xlane.xlu0 %532
      %v534 = vrot.slane %v533, 4
      %v535 = vadd.f32 %v533, %v534
      %v536 = vrot.slane %v535, 2
      %v537 = vadd.f32 %v535, %v536
      %v538 = vrot.slane %v537, 1
      %v539 = vadd.f32 %v537, %v538
      %s540 = vtos %v539
      %v541 = vmul.f32 %v509, %v509
      %v542 = vmul.f32 %v529, %v529
      %v543 = vadd.f32 %v541, %v542
      %544 = vadd.xlane.f32.xlu0 %v543
      %v545 = vpop.xlane.xlu0 %544
      %v546 = vrot.slane %v545, 4
      %v547 = vadd.f32 %v545, %v546
      %v548 = vrot.slane %v547, 2
      %v549 = vadd.f32 %v547, %v548
      %v550 = vrot.slane %v549, 1
      %v551 = vadd.f32 %v549, %v550
      %s552 = vtos %v551
      %v553 = vrcp.pop 2048.0
      %v554 = vmul.f32 2048.0, %v553
      %v555 = vsub.f32 1.0, %v554
      %v556 = vmul.f32 %v553, %v555
      %v557 = vadd.f32 %v553, %v556
      %vm558 = vweird.f32 %v553
      %v559 = vsel %vm558, %v553, %v557
      %s560 = vtos %v559
      %s561 = smul.f32 %s540, %s560
      %s562 = smul.f32 %s561, 2048.0
      %s563 = smul.f32 %s562, %s561
      %s564 = ssub.f32 %s552, %s563
      %v565 = vrcp.pop 2047.0
      %v566 = vmul.f32 2047.0, %v565
      %v567 = vsub.f32 1.0, %v566
      %v568 = vmul.f32 %v565, %v567
      %v569 = vadd.f32 %v565, %v568
      %vm570 = vweird.f32 %v565
      %v571 = vsel %vm570, %v565, %v569
      %s572 = vtos %v571
      %s573 = smul.f32 %s564, %s572
      %v574 = vstv %s561
      %v575 = vsub.f32 %v509, %v574
      %v576 = vsub.f32 %v529, %v574
      %s577 = sadd.f32 %s573, 1e-05
      %v578 = vstv %s577
      %v579 = vrsqrt.pop %v578
      %v580 = vmul.f32 %v579, %v578
      %v581 = vmul.f32 %v580, %v579
      %v582 = vmul.f32 0.5, %v581
      %v583 = vsub.f32 1.5, %v582
      %v584 = vmul.f32 %v579, %v583
      %vm585 = vweird.f32 %v578
      %vm586 = vweird.f32 %v579
      %vm587 = vmor %vm585, %vm586
      %v588 = vsel %vm587, %v579, %v584
      %s589 = vtos %v588
      %v590 = vstv %s589
      %v591 = vmul.f32 %v575, %v590
      %v592 = vmul.f32 %v576, %v590
      %v593 = vmax.f32 %v591, 0.0
      %v594 = vmax.f32 %v592, 0.0
      %v595 = vld [vmem:[%s4] sm:$0xff]
      %v596 = vld [vmem:[%s4 + $0x8] sm:$0xff]
      %v597 = vld [vmem:[%s4 + $0x10] sm:$0xff]
      %v598 = vld [vmem:[%s4 + $0x18] sm:$0xff]
      %v599 = vld [vmem:[%s4 + $0x20] sm:$0xff]
      %v600 = vld [vmem:[%s4 + $0x28] sm:$0xff]
      %v601 = vld [vmem:[%s4 + $0x30] sm:$0xff]
      %v602 = vld [vmem:[%s4 + $0x38] sm:$0xff]
      %v603 = vld [vmem:[%s4 + $0x40] sm:$0xff]
      %v604 = vld [vmem:[%s4 + $0x48] sm:$0xff]
      %v605 = vld [vmem:[%s4 + $0x50] sm:$0xff]
      %v606 = vld [vmem:[%s4 + $0x58] sm:$0xff]
      %v607 = vld [vmem:[%s4 + $0x60] sm:$0xff]
      %v608 = vld [vmem:[%s4 + $0x68] sm:$0xff]
      %v609 = vld [vmem:[%s4 + $0x70] sm:$0xff]
      %v610 = vld [vmem:[%s4 + $0x78] sm:$0xff]
      %v611 = vld [vmem:[%s4 + $0x80] sm:$0xff]
      %v612 = vld [vmem:[%s4 + $0x88] sm:$0xff]
      %v613 = vld [vmem:[%s4 + $0x90] sm:$0xff]
      %v614 = vld [vmem:[%s4 + $0x98] sm:$0xff]
      %v615 = vld [vmem:[%s4 + $0xa0] sm:$0xff]
      %v616 = vld [vmem:[%s4 + $0xa8] sm:$0xff]
      %v617 = vld [vmem:[%s4 + $0xb0] sm:$0xff]
      %v618 = vld [vmem:[%s4 + $0xb8] sm:$0xff]
      %v619 = vld [vmem:[%s4 + $0xc0] sm:$0xff]
      %v620 = vld [vmem:[%s4 + $0xc8] sm:$0xff]
      %v621 = vld [vmem:[%s4 + $0xd0] sm:$0xff]
      %v622 = vld [vmem:[%s4 + $0xd8] sm:$0xff]
      %v623 = vld [vmem:[%s4 + $0xe0] sm:$0xff]
      %v624 = vld [vmem:[%s4 + $0xe8] sm:$0xff]
      %v625 = vld [vmem:[%s4 + $0xf0] sm:$0xff]
      %v626 = vld [vmem:[%s4 + $0xf8] sm:$0xff]
      %v627 = vld [vmem:[%s5] sm:$0x1]
      %v629 = vperm.slane %v627, 0
      %631 = vmatpush.msra.mxu0 %v610
      %632 = vmatpush.msra.mxu0 %v609
      %633 = vmatpush.msra.mxu0 %v608
      %634 = vmatpush.msra.mxu0 %v607
      %635 = vmatpush.msra.mxu0 %v606
      %636 = vmatpush.msra.mxu0 %v605
      %637 = vmatpush.msra.mxu0 %v604
      %638 = vmatpush.msra.mxu0 %v603
      %639 = vmatpush.msra.mxu0 %v602
      %640 = vmatpush.msra.mxu0 %v601
      %641 = vmatpush.msra.mxu0 %v600
      %642 = vmatpush.msra.mxu0 %v599
      %643 = vmatpush.msra.mxu0 %v598
      %644 = vmatpush.msra.mxu0 %v597
      %645 = vmatpush.msra.mxu0 %v596
      %646 = vmatpush.msra.mxu0 %v595
      %647 = vmatmul.f32.gmra.mxu0 %v593
      %v648 = vpop.f32.mrf.mxu0
      %v649 = vadd.f32 %v629, %v648
      %650 = vdwg.mxu0
      %651 = vmatpush.msra.mxu0 %v626
      %652 = vmatpush.msra.mxu0 %v625
      %653 = vmatpush.msra.mxu0 %v624
      %654 = vmatpush.msra.mxu0 %v623
      %655 = vmatpush.msra.mxu0 %v622
      %656 = vmatpush.msra.mxu0 %v621
      %657 = vmatpush.msra.mxu0 %v620
      %658 = vmatpush.msra.mxu0 %v619
      %659 = vmatpush.msra.mxu0 %v618
      %660 = vmatpush.msra.mxu0 %v617
      %661 = vmatpush.msra.mxu0 %v616
      %662 = vmatpush.msra.mxu0 %v615
      %663 = vmatpush.msra.mxu0 %v614
      %664 = vmatpush.msra.mxu0 %v613
      %665 = vmatpush.msra.mxu0 %v612
      %666 = vmatpush.msra.mxu0 %v611
      %667 = vmatmul.f32.gmra.mxu0 %v594
      %v668 = vpop.f32.mrf.mxu0
      %v669 = vadd.f32 %v649, %v668
      %670 = vdwg.mxu0
      %671 = vadd.xlane.f32.xlu0 %v669
      %v672 = vpop.xlane.xlu0 %671
      %v673 = vrot.slane %v672, 4
      %v674 = vadd.f32 %v672, %v673
      %v675 = vrot.slane %v674, 2
      %v676 = vadd.f32 %v674, %v675
      %v677 = vrot.slane %v676, 1
      %v678 = vadd.f32 %v676, %v677
      %s679 = vtos %v678
      %v680 = vmul.f32 %v669, %v669
      %681 = vadd.xlane.f32.xlu0 %v680
      %v682 = vpop.xlane.xlu0 %681
      %v683 = vrot.slane %v682, 4
      %v684 = vadd.f32 %v682, %v683
      %v685 = vrot.slane %v684, 2
      %v686 = vadd.f32 %v684, %v685
      %v687 = vrot.slane %v686, 1
      %v688 = vadd.f32 %v686, %v687
      %s689 = vtos %v688
      %v690 = vrcp.pop 1024.0
      %v691 = vmul.f32 1024.0, %v690
      %v692 = vsub.f32 1.0, %v691
      %v693 = vmul.f32 %v690, %v692
      %v694 = vadd.f32 %v690, %v693
      %vm695 = vweird.f32 %v690
      %v696 = vsel %vm695, %v690, %v694
      %s697 = vtos %v696
      %s698 = smul.f32 %s679, %s697
      %s699 = smul.f32 %s698, 1024.0
      %s700 = smul.f32 %s699, %s698
      %s701 = ssub.f32 %s689, %s700
      %v702 = vrcp.pop 1023.0
      %v703 = vmul.f32 1023.0, %v702
      %v704 = vsub.f32 1.0, %v703
      %v705 = vmul.f32 %v702, %v704
      %v706 = vadd.f32 %v702, %v705
      %vm707 = vweird.f32 %v702
      %v708 = vsel %vm707, %v702, %v706
      %s709 = vtos %v708
      %s710 = smul.f32 %s701, %s709
      %v711 = vstv %s698
      %v712 = vsub.f32 %v669, %v711
      %s713 = sadd.f32 %s710, 1e-05
      %v714 = vstv %s713
      %v715 = vrsqrt.pop %v714
      %v716 = vmul.f32 %v715, %v714
      %v717 = vmul.f32 %v716, %v715
      %v718 = vmul.f32 0.5, %v717
      %v719 = vsub.f32 1.5, %v718
      %v720 = vmul.f32 %v715, %v719
      %vm721 = vweird.f32 %v714
      %vm722 = vweird.f32 %v715
      %vm723 = vmor %vm721, %vm722
      %v724 = vsel %vm723, %v715, %v720
      %s725 = vtos %v724
      %v726 = vstv %s725
      %v727 = vmul.f32 %v712, %v726
      %v728 = vmax.f32 %v727, 0.0
      %v729 = vld [vmem:[%s6] sm:$0xff]
      %v730 = vld [vmem:[%s6 + $0x8] sm:$0xff]
      %v731 = vld [vmem:[%s6 + $0x10] sm:$0xff]
      %v732 = vld [vmem:[%s6 + $0x18] sm:$0xff]
      %v733 = vld [vmem:[%s6 + $0x20] sm:$0xff]
      %v734 = vld [vmem:[%s6 + $0x28] sm:$0xff]
      %v735 = vld [vmem:[%s6 + $0x30] sm:$0xff]
      %v736 = vld [vmem:[%s6 + $0x38] sm:$0xff]
      %v737 = vld [vmem:[%s6 + $0x40] sm:$0xff]
      %v738 = vld [vmem:[%s6 + $0x48] sm:$0xff]
      %v739 = vld [vmem:[%s6 + $0x50] sm:$0xff]
      %v740 = vld [vmem:[%s6 + $0x58] sm:$0xff]
      %v741 = vld [vmem:[%s6 + $0x60] sm:$0xff]
      %v742 = vld [vmem:[%s6 + $0x68] sm:$0xff]
      %v743 = vld [vmem:[%s6 + $0x70] sm:$0xff]
      %v744 = vld [vmem:[%s6 + $0x78] sm:$0xff]
      %v745 = vld [vmem:[%s7] sm:$0x1]
      %v747 = vperm.slane %v745, 0
      %749 = vmatpush.msra.mxu0 %v744
      %750 = vmatpush.msra.mxu0 %v743
      %751 = vmatpush.msra.mxu0 %v742
      %752 = vmatpush.msra.mxu0 %v741
      %753 = vmatpush.msra.mxu0 %v740
      %754 = vmatpush.msra.mxu0 %v739
      %755 = vmatpush.msra.mxu0 %v738
      %756 = vmatpush.msra.mxu0 %v737
      %757 = vmatpush.msra.mxu0 %v736
      %758 = vmatpush.msra.mxu0 %v735
      %759 = vmatpush.msra.mxu0 %v734
      %760 = vmatpush.msra.mxu0 %v733
      %761 = vmatpush.msra.mxu0 %v732
      %762 = vmatpush.msra.mxu0 %v731
      %763 = vmatpush.msra.mxu0 %v730
      %764 = vmatpush.msra.mxu0 %v729
      %765 = vmatmul.f32.gmra.mxu0 %v728
      %v766 = vpop.f32.mrf.mxu0
      %v767 = vadd.f32 %v747, %v766
      %768 = vdwg.mxu0
      %v769 = vadd.f32 %v767, %v479
      %v770 = vmax.f32 %v769, 0.0
      %771 = vst.msk [vmem:[%s377] sm:$0xff] %vm397, %v770
      %p772 = scmp.lt.s32.totalorder %s21, 1
      %s773 = scalar_select %p772, %s21, 1
      %s774 = smul.addr %s773, 8
      %s775 = scalar_lea.vmem %s10, %s774
      // Predicated region
      $region61: #{cube_downsample_v2_forward.1} parent=59 // pred_check
        %p776 = pneg %p259
      $region62: #{cube_downsample_v2_forward.1} parent=59 // pred_check_branch
        %778 = sbr.rel (%p776) target = $region64
      $region63: #{cube_downsample_v2_forward.1} parent=59 // pred_region
        _
      $region64: #{cube_downsample_v2_forward.1} parent=59 // pred_fallthru
        _
    $region60: #{cube_downsample_v2_forward.1} parent=5 // pred_fallthru
      _
    %p779 = scmp.le.s32.totalorder 2, %s16
    // Predicated region
    $region65: #{cube_downsample_v2_forward.1} parent=5 // pred_check
      %p780 = pneg %p779
    $region66: #{cube_downsample_v2_forward.1} parent=5 // pred_check_branch
      %782 = sbr.rel (%p780) target = $region68
    $region67: #{cube_downsample_v2_forward.1} parent=5 // pred_region
      %s783 = ssub.s32 %s16, 2
      // Predicated region
      $region69: #{cube_downsample_v2_forward.1} parent=67 // pred_check
        %p784 = pneg %p265
      $region70: #{cube_downsample_v2_forward.1} parent=67 // pred_check_branch
        %786 = sbr.rel (%p784) target = $region72
      $region71: #{cube_downsample_v2_forward.1} parent=67 // pred_region
        %p787 = scmp.lt.s32.totalorder %s22, 1
        %s788 = scalar_select %p787, %s22, 1
        %s789 = smul.addr %s788, 8
        %s790 = scalar_lea.vmem %s10, %s789
      $region72: #{cube_downsample_v2_forward.1} parent=67 // pred_fallthru
        _
    $region68: #{cube_downsample_v2_forward.1} parent=5 // pred_fallthru
      _
  $region6: #{cube_downsample_v2_forward.1} parent=0 // loop_footer
    %s20 = sadd.s32 1, %s16
  $region7: #{cube_downsample_v2_forward.1} parent=0 // loop_footer_branch
    %15 = sbr.rel target = $region3
  $region8: #{cube_downsample_v2_forward.1} parent=0 // loop_exit
    _

</llo_original>
